<compile_context>
chip_gen: v6e
topology: v6e:2x2x1
jax: 0.10.0
libtpu: 0.0.40
codegen_flags: <defaults>
</compile_context>

<pallas_src>
import functools

import jax
import jax.numpy as jnp
import numpy as np
from jax.experimental import pallas as pl
from jax.experimental.pallas import tpu as pltpu


def _bottleneck_kernel(x_ref, masks_ref, w1_ref, w2_ref, w3_ref, b_ref,
                       out_ref, *, offsets):
    # x_ref    : (KB, Cin, L)    flattened NCHW input, L = H*W lane-padded
    # masks_ref: (9, L)          per-tap validity masks (conv2 zero padding)
    # w1_ref   : (P, Cin)        conv1 1x1, BN1 scale folded in
    # w2_ref   : (P, 9*P)        conv2 3x3 (columns: tap k=ky*3+kx, cin), BN2 folded
    # w3_ref   : (Cout, P)       conv3 1x1, BN3 scale folded in
    # b_ref    : (2*P8+Cout8, 1) packed BN biases [b1 | b2 | b3], 8-row aligned
    # out_ref  : (KB, Cout, L)
    KB = x_ref.shape[0]
    L = x_ref.shape[-1]
    P = w1_ref.shape[0]
    Cout = w3_ref.shape[0]
    P8 = -(-P // 8) * 8

    w1 = w1_ref[...]
    w2 = w2_ref[...]
    w3 = w3_ref[...]
    b1 = b_ref[0:P, :]                      # (P, 1)
    b2 = b_ref[P8:P8 + P, :]                # (P, 1)
    b3 = b_ref[2 * P8:2 * P8 + Cout, :]     # (Cout, 1)
    masks = masks_ref[...]                  # (9, L)

    for b in range(KB):                     # static unroll over images in block
        x = x_ref[b]                        # (Cin, L)

        # --- conv1 (1x1) + BN1 + ReLU (scale pre-folded into w1) -------------
        y1 = jnp.dot(w1, x, preferred_element_type=jnp.float32) + b1
        y1 = jnp.maximum(y1, 0.0)

        # --- conv2 (3x3, stride=1, pad=1) as ONE K = 9*P matmul --------------
        # Tap (ky,kx) at output pixel c is y1[:, c + (ky-1)*W + (kx-1)]; bring
        # it in place with a full-width lane roll and zero the out-of-image
        # (padding) positions with the precomputed per-tap mask.
        taps = []
        for k, off in enumerate(offsets):
            t = y1 if off == 0 else pltpu.roll(y1, shift=(-off) % L, axis=1)
            taps.append(t * masks[k:k + 1, :])
        stack = jnp.concatenate(taps, axis=0)            # (9*P, L), in vregs
        y2 = jnp.dot(w2, stack, preferred_element_type=jnp.float32) + b2
        y2 = jnp.maximum(y2, 0.0)

        # --- conv3 (1x1) + BN3 + residual + ReLU -----------------------------
        y3 = jnp.dot(w3, y2, preferred_element_type=jnp.float32) + b3 + x
        out_ref[b] = jnp.maximum(y3, 0.0)


def _pick_images_per_block(n, cin, cout, p, l):
    """Images per grid step: amortize per-step overhead, keep >= 2 blocks when
    N >= 2 (so dual-TC v7x gets parallel work) and stay under a conservative
    16 MiB scoped-VMEM budget valid on v5e/v6e/v7x defaults."""
    budget = 16 << 20
    min_blocks = 2 if n >= 2 else 1
    best = 1
    for kb in range(1, n + 1):
        if n % kb != 0 or n // kb < min_blocks:
            continue
        io = 2 * 2 * kb * (cin + cout) * l * 4        # double-buffered x + out
        live = (12 * p + cout) * l * 4                # y1 + tap stack + y2 headroom
        if io + live <= budget:
            best = kb
    return best


def bottleneck_forward(x_nchw, params, *, images_per_block=None):
    """x_nchw: (N, Cin, H, W) float32; params: make_params(...)[1]."""
    w1, w2, w3, b_all = params
    N, Cin, H, W = x_nchw.shape
    P = w1.shape[0]
    Cout = w3.shape[0]
    assert Cout == Cin, "residual path requires Cin == Cout (downsample=None)"
    # TODO(synk): stride != 1 and the downsample branch of Bottleneck are not
    # implemented (the reference config uses stride=1, downsample=None).

    HW = H * W
    L = -(-HW // 128) * 128                 # lane-dense flat spatial length
    offsets = tuple((ky - 1) * W + (kx - 1)
                    for ky in range(3) for kx in range(3))

    # Per-tap output-position masks: tap (dy,dx) contributes to output pixel
    # (h,w) iff (h+dy, w+dx) is inside the image (== conv2 zero padding) and
    # the flat index is not in the lane tail.  Built in numpy -> constant.
    idx = np.arange(L)
    hh, ww = idx // W, idx % W
    in_img = idx < HW
    masks = np.stack([
        (in_img & (hh + dy >= 0) & (hh + dy < H)
         & (ww + dx >= 0) & (ww + dx < W))
        for dy in (-1, 0, 1) for dx in (-1, 0, 1)
    ]).astype(np.float32)                   # (9, L)
    masks = jnp.asarray(masks)

    # NCHW -> (N, Cin, H*W): contiguous collapse, no HBM pass.
    x_flat = x_nchw.reshape(N, Cin, HW)
    if L != HW:
        x_flat = jnp.pad(x_flat, ((0, 0), (0, 0), (0, L - HW)))

    if images_per_block is None:
        images_per_block = _pick_images_per_block(N, Cin, Cout, P, L)
    KB = images_per_block
    assert N % KB == 0
    grid = (N // KB,)
    B = b_all.shape[0]

    kernel = functools.partial(_bottleneck_kernel, offsets=offsets)
    out = pl.pallas_call(
        kernel,
        out_shape=jax.ShapeDtypeStruct((N, Cout, L), jnp.float32),
        grid_spec=pltpu.PrefetchScalarGridSpec(
            num_scalar_prefetch=0,
            grid=grid,
            in_specs=[
                pl.BlockSpec((KB, Cin, L), lambda i: (i, 0, 0)),
                pl.BlockSpec((9, L), lambda i: (0, 0)),
                pl.BlockSpec((P, Cin), lambda i: (0, 0)),
                pl.BlockSpec((P, 9 * P), lambda i: (0, 0)),
                pl.BlockSpec((Cout, P), lambda i: (0, 0)),
                pl.BlockSpec((B, 1), lambda i: (0, 0)),
            ],
            out_specs=pl.BlockSpec((KB, Cout, L), lambda i: (i, 0, 0)),
        ),
        compiler_params=pltpu.CompilerParams(
            dimension_semantics=("parallel",)),
    )(x_flat, masks, w1, w2, w3, b_all)

    if L != HW:
        out = out[:, :, :HW]
    return out.reshape(N, Cout, H, W)


def make_params(key, inplanes, planes, expansion=4, eps=1e-5):
    """Synthetic weights: PyTorch layout (raw) + kernel layout (params)."""
    outplanes = planes * expansion
    ks = jax.random.split(key, 6)

    w1_pt = 0.1 * jax.random.normal(ks[0], (planes, inplanes, 1, 1), jnp.float32)
    w2_pt = 0.1 * jax.random.normal(ks[1], (planes, planes, 3, 3), jnp.float32)
    w3_pt = 0.1 * jax.random.normal(ks[2], (outplanes, planes, 1, 1), jnp.float32)

    def bn_params(k, c):
        kg, kb, km, kv = jax.random.split(k, 4)
        gamma = 1.0 + 0.1 * jax.random.normal(kg, (c,), jnp.float32)
        beta = 0.1 * jax.random.normal(kb, (c,), jnp.float32)
        mean = 0.1 * jax.random.normal(km, (c,), jnp.float32)
        var = 1.0 + 0.1 * jax.random.uniform(kv, (c,), jnp.float32)
        return gamma, beta, mean, var

    bn1 = bn_params(ks[3], planes)
    bn2 = bn_params(ks[4], planes)
    bn3 = bn_params(ks[5], outplanes)
    raw = (w1_pt, w2_pt, w3_pt, bn1, bn2, bn3)

    def fold(bn):
        g, b, m, v = bn
        s = g / jnp.sqrt(v + eps)
        return s, b - m * s                     # scale, bias (eval semantics)

    s1, b1 = fold(bn1)
    s2, b2 = fold(bn2)
    s3, b3 = fold(bn3)

    # BN scales folded into the conv weights (per output channel = row).
    w1k = w1_pt[:, :, 0, 0] * s1[:, None]                                # (P, Cin)
    w2k = (jnp.transpose(w2_pt, (0, 2, 3, 1))
           .reshape(planes, 9 * planes)) * s2[:, None]                   # (P, 9P)
    w3k = w3_pt[:, :, 0, 0] * s3[:, None]                                # (4P, P)

    def pad8(v):                                 # (C,) -> (ceil8(C), 1)
        return jnp.pad(v, (0, (-v.shape[0]) % 8))[:, None]

    b_all = jnp.concatenate([pad8(b1), pad8(b2), pad8(b3)], axis=0)      # (32, 1)
    params = (w1k, w2k, w3k, b_all)
    return raw, params


def ref_forward(x, raw, eps=1e-5):
    """Pure-JAX reference mirroring the PyTorch module (eval-mode BN)."""
    w1_pt, w2_pt, w3_pt, bn1, bn2, bn3 = raw

    def conv(v, w, padding=0):
        return jax.lax.conv_general_dilated(
            v, w, window_strides=(1, 1),
            padding=((padding, padding), (padding, padding)),
            dimension_numbers=("NCHW", "OIHW", "NCHW"),
            precision=jax.lax.Precision.HIGHEST)

    def bn(v, p):
        g, b, m, var = p
        s = g / jnp.sqrt(var + eps)
        return v * s[None, :, None, None] + (b - m * s)[None, :, None, None]

    out = jax.nn.relu(bn(conv(x, w1_pt), bn1))
    out = jax.nn.relu(bn(conv(out, w2_pt, padding=1), bn2))
    out = bn(conv(out, w3_pt), bn3)
    return jax.nn.relu(out + x)


if __name__ == "__main__":
    N, inplanes, H, W = 2, 16, 16, 16
    planes = 4                     # expansion=4 -> outplanes = 16 == inplanes

    key = jax.random.PRNGKey(0)
    kx, kp = jax.random.split(key)
    x = jax.random.normal(kx, (N, inplanes, H, W), jnp.float32)
    raw, params = make_params(kp, inplanes, planes)

    out = jax.block_until_ready(bottleneck_forward(x, params))
    ref = jax.block_until_ready(ref_forward(x, raw))
    np.testing.assert_allclose(np.asarray(out), np.asarray(ref),
                               rtol=1e-4, atol=1e-4)
    print("KERNEL_OK")
</pallas_src>

<mosaic_0001>
module attributes {stable_mosaic.version = 11 : i64} {
  func.func @_bottleneck_kernel(%arg0: i32, %arg1: memref<1x16x256xf32, #tpu.memory_space<vmem>>, %arg2: memref<9x256xf32, #tpu.memory_space<vmem>>, %arg3: memref<4x16xf32, #tpu.memory_space<vmem>>, %arg4: memref<4x36xf32, #tpu.memory_space<vmem>>, %arg5: memref<16x4xf32, #tpu.memory_space<vmem>>, %arg6: memref<32x1xf32, #tpu.memory_space<vmem>>, %arg7: memref<1x16x256xf32, #tpu.memory_space<vmem>>) attributes {dimension_semantics = [#tpu.dimension_semantics<parallel>], iteration_bounds = array<i64: 2>, scalar_prefetch = 0 : i64, scratch_operands = 0 : i64, tpu.core_type = #tpu.core_type<tc>, window_params = [{transform_indices = @transform_0, window_bounds = array<i64: 1, 16, 256>}, {pipeline_mode = #tpu.pipeline_mode<synchronous>, transform_indices = @transform_1, window_bounds = array<i64: 9, 256>}, {pipeline_mode = #tpu.pipeline_mode<synchronous>, transform_indices = @transform_2, window_bounds = array<i64: 4, 16>}, {pipeline_mode = #tpu.pipeline_mode<synchronous>, transform_indices = @transform_3, window_bounds = array<i64: 4, 36>}, {pipeline_mode = #tpu.pipeline_mode<synchronous>, transform_indices = @transform_4, window_bounds = array<i64: 16, 4>}, {pipeline_mode = #tpu.pipeline_mode<synchronous>, transform_indices = @transform_5, window_bounds = array<i64: 32, 1>}, {transform_indices = @transform_6, window_bounds = array<i64: 1, 16, 256>}]} {
    %c0 = arith.constant 0 : index
    %c0_0 = arith.constant 0 : index
    %0 = vector.load %arg3[%c0, %c0_0] : memref<4x16xf32, #tpu.memory_space<vmem>>, vector<4x16xf32>
    %c0_1 = arith.constant 0 : index
    %c0_2 = arith.constant 0 : index
    %1 = vector.load %arg4[%c0_1, %c0_2] : memref<4x36xf32, #tpu.memory_space<vmem>>, vector<4x36xf32>
    %c0_3 = arith.constant 0 : index
    %c0_4 = arith.constant 0 : index
    %2 = vector.load %arg5[%c0_3, %c0_4] : memref<16x4xf32, #tpu.memory_space<vmem>>, vector<16x4xf32>
    %c0_5 = arith.constant 0 : index
    %c0_6 = arith.constant 0 : index
    %3 = vector.load %arg6[%c0_5, %c0_6] : memref<32x1xf32, #tpu.memory_space<vmem>>, vector<4x1xf32>
    %c8 = arith.constant 8 : index
    %c0_7 = arith.constant 0 : index
    %4 = vector.load %arg6[%c8, %c0_7] : memref<32x1xf32, #tpu.memory_space<vmem>>, vector<4x1xf32>
    %c16 = arith.constant 16 : index
    %c0_8 = arith.constant 0 : index
    %5 = vector.load %arg6[%c16, %c0_8] : memref<32x1xf32, #tpu.memory_space<vmem>>, vector<16x1xf32>
    %c0_9 = arith.constant 0 : index
    %c0_10 = arith.constant 0 : index
    %6 = vector.load %arg2[%c0_9, %c0_10] : memref<9x256xf32, #tpu.memory_space<vmem>>, vector<9x256xf32>
    %c0_11 = arith.constant 0 : index
    %c0_12 = arith.constant 0 : index
    %c0_13 = arith.constant 0 : index
    %7 = vector.load %arg1[%c0_11, %c0_12, %c0_13] : memref<1x16x256xf32, #tpu.memory_space<vmem>>, vector<1x16x256xf32>
    %8 = vector.shape_cast %7 : vector<1x16x256xf32> to vector<16x256xf32>
    %cst = arith.constant dense<0.000000e+00> : vector<4x256xf32>
    %9 = tpu.matmul %0, %8, %cst {dimension_numbers = #tpu.dot_dimension_numbers<[1], [0], [0], [1], [0, 0, 1, 1], [], []>} : vector<4x16xf32>, vector<16x256xf32>, vector<4x256xf32> -> vector<4x256xf32>
    %10 = vector.broadcast %3 : vector<4x1xf32> to vector<4x256xf32>
    %11 = arith.addf %9, %10 : vector<4x256xf32>
    %cst_14 = arith.constant 0.000000e+00 : f32
    %12 = vector.broadcast %cst_14 : f32 to vector<4x256xf32>
    %13 = arith.maximumf %11, %12 : vector<4x256xf32>
    %c17_i32 = arith.constant 17 : i32
    %14 = tpu.dynamic_rotate %13 by %c17_i32 dim 1 : vector<4x256xf32>, i32 -> vector<4x256xf32>
    %15 = vector.extract_strided_slice %6 {offsets = [0, 0], sizes = [1, 256], strides = [1, 1]} : vector<9x256xf32> to vector<1x256xf32>
    %16 = vector.broadcast %15 : vector<1x256xf32> to vector<4x256xf32>
    %17 = arith.mulf %14, %16 : vector<4x256xf32>
    %c16_i32 = arith.constant 16 : i32
    %18 = tpu.dynamic_rotate %13 by %c16_i32 dim 1 : vector<4x256xf32>, i32 -> vector<4x256xf32>
    %19 = vector.extract_strided_slice %6 {offsets = [1, 0], sizes = [1, 256], strides = [1, 1]} : vector<9x256xf32> to vector<1x256xf32>
    %20 = vector.broadcast %19 : vector<1x256xf32> to vector<4x256xf32>
    %21 = arith.mulf %18, %20 : vector<4x256xf32>
    %c15_i32 = arith.constant 15 : i32
    %22 = tpu.dynamic_rotate %13 by %c15_i32 dim 1 : vector<4x256xf32>, i32 -> vector<4x256xf32>
    %23 = vector.extract_strided_slice %6 {offsets = [2, 0], sizes = [1, 256], strides = [1, 1]} : vector<9x256xf32> to vector<1x256xf32>
    %24 = vector.broadcast %23 : vector<1x256xf32> to vector<4x256xf32>
    %25 = arith.mulf %22, %24 : vector<4x256xf32>
    %c1_i32 = arith.constant 1 : i32
    %26 = tpu.dynamic_rotate %13 by %c1_i32 dim 1 : vector<4x256xf32>, i32 -> vector<4x256xf32>
    %27 = vector.extract_strided_slice %6 {offsets = [3, 0], sizes = [1, 256], strides = [1, 1]} : vector<9x256xf32> to vector<1x256xf32>
    %28 = vector.broadcast %27 : vector<1x256xf32> to vector<4x256xf32>
    %29 = arith.mulf %26, %28 : vector<4x256xf32>
    %30 = vector.extract_strided_slice %6 {offsets = [4, 0], sizes = [1, 256], strides = [1, 1]} : vector<9x256xf32> to vector<1x256xf32>
    %31 = vector.broadcast %30 : vector<1x256xf32> to vector<4x256xf32>
    %32 = arith.mulf %13, %31 : vector<4x256xf32>
    %c255_i32 = arith.constant 255 : i32
    %33 = tpu.dynamic_rotate %13 by %c255_i32 dim 1 : vector<4x256xf32>, i32 -> vector<4x256xf32>
    %34 = vector.extract_strided_slice %6 {offsets = [5, 0], sizes = [1, 256], strides = [1, 1]} : vector<9x256xf32> to vector<1x256xf32>
    %35 = vector.broadcast %34 : vector<1x256xf32> to vector<4x256xf32>
    %36 = arith.mulf %33, %35 : vector<4x256xf32>
    %c241_i32 = arith.constant 241 : i32
    %37 = tpu.dynamic_rotate %13 by %c241_i32 dim 1 : vector<4x256xf32>, i32 -> vector<4x256xf32>
    %38 = vector.extract_strided_slice %6 {offsets = [6, 0], sizes = [1, 256], strides = [1, 1]} : vector<9x256xf32> to vector<1x256xf32>
    %39 = vector.broadcast %38 : vector<1x256xf32> to vector<4x256xf32>
    %40 = arith.mulf %37, %39 : vector<4x256xf32>
    %c240_i32 = arith.constant 240 : i32
    %41 = tpu.dynamic_rotate %13 by %c240_i32 dim 1 : vector<4x256xf32>, i32 -> vector<4x256xf32>
    %42 = vector.extract_strided_slice %6 {offsets = [7, 0], sizes = [1, 256], strides = [1, 1]} : vector<9x256xf32> to vector<1x256xf32>
    %43 = vector.broadcast %42 : vector<1x256xf32> to vector<4x256xf32>
    %44 = arith.mulf %41, %43 : vector<4x256xf32>
    %c239_i32 = arith.constant 239 : i32
    %45 = tpu.dynamic_rotate %13 by %c239_i32 dim 1 : vector<4x256xf32>, i32 -> vector<4x256xf32>
    %46 = vector.extract_strided_slice %6 {offsets = [8, 0], sizes = [1, 256], strides = [1, 1]} : vector<9x256xf32> to vector<1x256xf32>
    %47 = vector.broadcast %46 : vector<1x256xf32> to vector<4x256xf32>
    %48 = arith.mulf %45, %47 : vector<4x256xf32>
    %49 = tpu.concatenate %17, %21, %25, %29, %32, %36, %40, %44, %48 in 0 : vector<4x256xf32>, vector<4x256xf32>, vector<4x256xf32>, vector<4x256xf32>, vector<4x256xf32>, vector<4x256xf32>, vector<4x256xf32>, vector<4x256xf32>, vector<4x256xf32> -> vector<36x256xf32>
    %cst_15 = arith.constant dense<0.000000e+00> : vector<4x256xf32>
    %50 = tpu.matmul %1, %49, %cst_15 {dimension_numbers = #tpu.dot_dimension_numbers<[1], [0], [0], [1], [0, 0, 1, 1], [], []>} : vector<4x36xf32>, vector<36x256xf32>, vector<4x256xf32> -> vector<4x256xf32>
    %51 = vector.broadcast %4 : vector<4x1xf32> to vector<4x256xf32>
    %52 = arith.addf %50, %51 : vector<4x256xf32>
    %cst_16 = arith.constant 0.000000e+00 : f32
    %53 = vector.broadcast %cst_16 : f32 to vector<4x256xf32>
    %54 = arith.maximumf %52, %53 : vector<4x256xf32>
    %cst_17 = arith.constant dense<0.000000e+00> : vector<16x256xf32>
    %55 = tpu.matmul %2, %54, %cst_17 {dimension_numbers = #tpu.dot_dimension_numbers<[1], [0], [0], [1], [0, 0, 1, 1], [], []>} : vector<16x4xf32>, vector<4x256xf32>, vector<16x256xf32> -> vector<16x256xf32>
    %56 = vector.broadcast %5 : vector<16x1xf32> to vector<16x256xf32>
    %57 = arith.addf %55, %56 : vector<16x256xf32>
    %58 = arith.addf %57, %8 : vector<16x256xf32>
    %cst_18 = arith.constant 0.000000e+00 : f32
    %59 = vector.broadcast %cst_18 : f32 to vector<16x256xf32>
    %60 = arith.maximumf %58, %59 : vector<16x256xf32>
    %c0_19 = arith.constant 0 : index
    %c0_20 = arith.constant 0 : index
    %c0_21 = arith.constant 0 : index
    %61 = vector.load %arg7[%c0_19, %c0_20, %c0_21] : memref<1x16x256xf32, #tpu.memory_space<vmem>>, vector<1x16x256xf32>
    %62 = vector.shape_cast %61 : vector<1x16x256xf32> to vector<16x256xf32>
    %63 = vector.shape_cast %60 : vector<16x256xf32> to vector<1x16x256xf32>
    tpu.vector_store %arg7[%c0_19, %c0_20, %c0_21], %63 {strides = array<i32>} : memref<1x16x256xf32, #tpu.memory_space<vmem>>, vector<1x16x256xf32>,
    return
  }
  func.func @transform_0(%arg0: i32) -> (i32, i32, i32) {
    %c0_i32 = arith.constant 0 : i32
    %c0_i32_0 = arith.constant 0 : i32
    %c0_i32_1 = arith.constant 0 : i32
    return %arg0, %c0_i32, %c0_i32_0 : i32, i32, i32
  }
  func.func @transform_1(%arg0: i32) -> (i32, i32) {
    %c0_i32 = arith.constant 0 : i32
    %c0_i32_0 = arith.constant 0 : i32
    %c0_i32_1 = arith.constant 0 : i32
    return %c0_i32, %c0_i32_0 : i32, i32
  }
  func.func @transform_2(%arg0: i32) -> (i32, i32) {
    %c0_i32 = arith.constant 0 : i32
    %c0_i32_0 = arith.constant 0 : i32
    %c0_i32_1 = arith.constant 0 : i32
    return %c0_i32, %c0_i32_0 : i32, i32
  }
  func.func @transform_3(%arg0: i32) -> (i32, i32) {
    %c0_i32 = arith.constant 0 : i32
    %c0_i32_0 = arith.constant 0 : i32
    %c0_i32_1 = arith.constant 0 : i32
    return %c0_i32, %c0_i32_0 : i32, i32
  }
  func.func @transform_4(%arg0: i32) -> (i32, i32) {
    %c0_i32 = arith.constant 0 : i32
    %c0_i32_0 = arith.constant 0 : i32
    %c0_i32_1 = arith.constant 0 : i32
    return %c0_i32, %c0_i32_0 : i32, i32
  }
  func.func @transform_5(%arg0: i32) -> (i32, i32) {
    %c0_i32 = arith.constant 0 : i32
    %c0_i32_0 = arith.constant 0 : i32
    %c0_i32_1 = arith.constant 0 : i32
    return %c0_i32, %c0_i32_0 : i32, i32
  }
  func.func @transform_6(%arg0: i32) -> (i32, i32, i32) {
    %c0_i32 = arith.constant 0 : i32
    %c0_i32_0 = arith.constant 0 : i32
    %c0_i32_1 = arith.constant 0 : i32
    return %arg0, %c0_i32, %c0_i32_0 : i32, i32, i32
  }
}

</mosaic_0001>

<llo_original>
// kernel: tpu_custom_call.1
$region0: #{tpu_custom_call.1}
  #allocation0 [shape = 'u32[]', space=smem, size = 0x4, offset = 0x4, fixed_abs, tag = 'smem constant byte address 0x4 - core index']
  #allocation1 [shape = 'u32[144,128]{1,0:T(1,128)}', space=vmem, size = 0x12000, scoped, tag = 'internal scratch']
  %s0 = inlined_call_operand.hbm [shape: f32[2,16,256], index: 0, kind: input, shape index: {}]
  %s1 = inlined_call_operand.vmem [shape: f32[9,256], index: 1, kind: input, shape index: {}]
  %s2 = inlined_call_operand.vmem [shape: f32[4,16], index: 2, kind: input, shape index: {}]
  %s3 = inlined_call_operand.vmem [shape: f32[4,36], index: 3, kind: input, shape index: {}]
  %s4 = inlined_call_operand.vmem [shape: f32[16,4], index: 4, kind: input, shape index: {}]
  %s5 = inlined_call_operand.vmem [shape: f32[32,1], index: 5, kind: input, shape index: {}]
  %s6 = inlined_call_operand.hbm [shape: f32[2,16,256], index: 6, kind: output, shape index: {}]
  %s7 = sld [smem:[#allocation0]]
  $region61: #{tpu_custom_call.1} parent=0
    _
  %s9 = ssub.s32 1, %s7
  %s10 = scalar_select 0, %s9, %s7
  $region1: #{tpu_custom_call.1} parent=0
    #allocation2 [shape = 'u8[32768]{0}', space=vmem, size = 0x8000, scoped, tag = 'input window, operand 0']
    #allocation3 [shape = 's32[2]{0}', space=sflag, size = 0x8, scoped, tag = 'scoped memory for tpu_custom_call.1']
    #allocation4 [shape = 's32[2]{0}', space=sflag, size = 0x8, scoped, tag = 'scoped memory for tpu_custom_call.1']
    #allocation5 [shape = 'u8[32768]{0}', space=vmem, size = 0x8000, scoped, tag = 'output window, operand 0']
    %11 = vsyncpa [#allocation3], 0
    %s12 = scalar_lea.sflag [#allocation3], 1
    %13 = vsyncpa %s12, 0
    %14 = vsyncpa [#allocation4], 0
    %s15 = scalar_lea.sflag [#allocation4], 1
    %16 = vsyncpa %s15, 0
    loop: start=0, step=1, limit=4
    $region2: #{tpu_custom_call.1} parent=1 // loop_pre_header
      _
    $region3: #{tpu_custom_call.1} parent=1 // loop_header
      %s18 = sphi 0, %s22
      %p19 = scmp.ge.s32.totalorder %s18, 4
      %s28 = sphi 0, %s30
      %s31 = sphi 0, %s28
      %s32 = sphi 0, %s31
      %s48 = sphi 0, %s32
      %s52 = sphi 0, %s52
      %s54 = sphi 0, %s52
      %s55 = sphi 0, %s54
      %s69 = sphi 0, %s55
      %s73 = sphi 0, %s73
      %s75 = sphi 0, %s73
      %s76 = sphi 0, %s75
      %s90 = sphi 0, %s76
      %s94 = sphi 0, %s94
      %s96 = sphi 0, %s94
      %s97 = sphi 0, %s96
      %s111 = sphi 0, %s97
      %s115 = sphi 0, %s115
      %s117 = sphi 0, %s115
      %s118 = sphi 0, %s117
      %s132 = sphi 0, %s118
      %s136 = sphi 0, %s136
      %s138 = sphi 0, %s136
      %s139 = sphi 0, %s138
      %s153 = sphi 0, %s139
      %s159 = sphi 0, %s161
      %s162 = sphi 0, %s159
      %s163 = sphi 0, %s162
      %s179 = sphi 0, %s163
    $region4: #{tpu_custom_call.1} parent=1 // loop_header_branch
      %21 = sbr.rel (%p19) target = $region8
    $region5: #{tpu_custom_call.1} parent=1 // loop_body
      %s23 = ssub.s32 %s18, 1
      %s24 = ssub.s32 %s18, 2
      %s25 = sadd.s32 %s18, 1
      %s26 = ssub.s32 %s18, %s25
      %p27 = scmp.eq.s32.totalorder %s26, 0
      %s29 = sadd.s32 %s28, 1
      %s30 = scalar_select %p27, %s28, %s29
      %p33 = pneg %p27
      %p34 = scmp.eq.s32.totalorder %s18, 1
      %p35 = por %p33, %p34
      %p36 = scmp.ne.s32.totalorder %s28, %s31
      %p37 = scmp.eq.s32.totalorder %s18, 0
      %p38 = por %p36, %p37
      %p39 = scmp.ne.s32.totalorder %s28, %s31
      %p40 = scmp.eq.s32.totalorder %s23, 1
      %p41 = por %p39, %p40
      %p42 = scmp.ne.s32.totalorder %s31, %s32
      %p43 = scmp.eq.s32.totalorder %s23, 0
      %p44 = por %p42, %p43
      %p45 = scmp.ne.s32.totalorder %s31, %s32
      %p46 = scmp.eq.s32.totalorder %s24, 1
      %p47 = por %p45, %p46
      %p49 = scmp.ne.s32.totalorder %s32, %s48
      %p50 = scmp.eq.s32.totalorder %s24, 0
      %p51 = por %p49, %p50
      %s53 = sadd.s32 %s52, 1
      %p56 = scmp.eq.s32.totalorder %s18, 1
      %p57 = scmp.ne.s32.totalorder %s52, %s54
      %p58 = scmp.eq.s32.totalorder %s18, 0
      %p59 = por %p57, %p58
      %p60 = scmp.ne.s32.totalorder %s52, %s54
      %p61 = scmp.eq.s32.totalorder %s23, 1
      %p62 = por %p60, %p61
      %p63 = scmp.ne.s32.totalorder %s54, %s55
      %p64 = scmp.eq.s32.totalorder %s23, 0
      %p65 = por %p63, %p64
      %p66 = scmp.ne.s32.totalorder %s54, %s55
      %p67 = scmp.eq.s32.totalorder %s24, 1
      %p68 = por %p66, %p67
      %p70 = scmp.ne.s32.totalorder %s55, %s69
      %p71 = scmp.eq.s32.totalorder %s24, 0
      %p72 = por %p70, %p71
      %s74 = sadd.s32 %s73, 1
      %p77 = scmp.eq.s32.totalorder %s18, 1
      %p78 = scmp.ne.s32.totalorder %s73, %s75
      %p79 = scmp.eq.s32.totalorder %s18, 0
      %p80 = por %p78, %p79
      %p81 = scmp.ne.s32.totalorder %s73, %s75
      %p82 = scmp.eq.s32.totalorder %s23, 1
      %p83 = por %p81, %p82
      %p84 = scmp.ne.s32.totalorder %s75, %s76
      %p85 = scmp.eq.s32.totalorder %s23, 0
      %p86 = por %p84, %p85
      %p87 = scmp.ne.s32.totalorder %s75, %s76
      %p88 = scmp.eq.s32.totalorder %s24, 1
      %p89 = por %p87, %p88
      %p91 = scmp.ne.s32.totalorder %s76, %s90
      %p92 = scmp.eq.s32.totalorder %s24, 0
      %p93 = por %p91, %p92
      %s95 = sadd.s32 %s94, 1
      %p98 = scmp.eq.s32.totalorder %s18, 1
      %p99 = scmp.ne.s32.totalorder %s94, %s96
      %p100 = scmp.eq.s32.totalorder %s18, 0
      %p101 = por %p99, %p100
      %p102 = scmp.ne.s32.totalorder %s94, %s96
      %p103 = scmp.eq.s32.totalorder %s23, 1
      %p104 = por %p102, %p103
      %p105 = scmp.ne.s32.totalorder %s96, %s97
      %p106 = scmp.eq.s32.totalorder %s23, 0
      %p107 = por %p105, %p106
      %p108 = scmp.ne.s32.totalorder %s96, %s97
      %p109 = scmp.eq.s32.totalorder %s24, 1
      %p110 = por %p108, %p109
      %p112 = scmp.ne.s32.totalorder %s97, %s111
      %p113 = scmp.eq.s32.totalorder %s24, 0
      %p114 = por %p112, %p113
      %s116 = sadd.s32 %s115, 1
      %p119 = scmp.eq.s32.totalorder %s18, 1
      %p120 = scmp.ne.s32.totalorder %s115, %s117
      %p121 = scmp.eq.s32.totalorder %s18, 0
      %p122 = por %p120, %p121
      %p123 = scmp.ne.s32.totalorder %s115, %s117
      %p124 = scmp.eq.s32.totalorder %s23, 1
      %p125 = por %p123, %p124
      %p126 = scmp.ne.s32.totalorder %s117, %s118
      %p127 = scmp.eq.s32.totalorder %s23, 0
      %p128 = por %p126, %p127
      %p129 = scmp.ne.s32.totalorder %s117, %s118
      %p130 = scmp.eq.s32.totalorder %s24, 1
      %p131 = por %p129, %p130
      %p133 = scmp.ne.s32.totalorder %s118, %s132
      %p134 = scmp.eq.s32.totalorder %s24, 0
      %p135 = por %p133, %p134
      %s137 = sadd.s32 %s136, 1
      %p140 = scmp.eq.s32.totalorder %s18, 1
      %p141 = scmp.ne.s32.totalorder %s136, %s138
      %p142 = scmp.eq.s32.totalorder %s18, 0
      %p143 = por %p141, %p142
      %p144 = scmp.ne.s32.totalorder %s136, %s138
      %p145 = scmp.eq.s32.totalorder %s23, 1
      %p146 = por %p144, %p145
      %p147 = scmp.ne.s32.totalorder %s138, %s139
      %p148 = scmp.eq.s32.totalorder %s23, 0
      %p149 = por %p147, %p148
      %p150 = scmp.ne.s32.totalorder %s138, %s139
      %p151 = scmp.eq.s32.totalorder %s24, 1
      %p152 = por %p150, %p151
      %p154 = scmp.ne.s32.totalorder %s139, %s153
      %p155 = scmp.eq.s32.totalorder %s24, 0
      %p156 = por %p154, %p155
      %s157 = ssub.s32 %s18, %s25
      %p158 = scmp.eq.s32.totalorder %s157, 0
      %s160 = sadd.s32 %s159, 1
      %s161 = scalar_select %p158, %s159, %s160
      %p164 = pneg %p158
      %p165 = scmp.eq.s32.totalorder %s18, 1
      %p166 = por %p164, %p165
      %p167 = scmp.ne.s32.totalorder %s159, %s162
      %p168 = scmp.eq.s32.totalorder %s18, 0
      %p169 = por %p167, %p168
      %p170 = scmp.ne.s32.totalorder %s159, %s162
      %p171 = scmp.eq.s32.totalorder %s23, 1
      %p172 = por %p170, %p171
      %p173 = scmp.ne.s32.totalorder %s162, %s163
      %p174 = scmp.eq.s32.totalorder %s23, 0
      %p175 = por %p173, %p174
      %p176 = scmp.ne.s32.totalorder %s162, %s163
      %p177 = scmp.eq.s32.totalorder %s24, 1
      %p178 = por %p176, %p177
      %p180 = scmp.ne.s32.totalorder %s163, %s179
      %p181 = scmp.eq.s32.totalorder %s24, 0
      %p182 = por %p180, %p181
      %p183 = scmp.le.s32.totalorder 1, %s18
      %p184 = scmp.lt.s32.totalorder %s18, 3
      %p185 = pnand %p183, %p184
      %p186 = pneg %p185
      // Predicated region
      $region9: #{tpu_custom_call.1} parent=5 // pred_check
        _
      $region10: #{tpu_custom_call.1} parent=5 // pred_check_branch
        %188 = sbr.rel (%p185) target = $region12
      $region11: #{tpu_custom_call.1} parent=5 // pred_region
        %s189 = ssub.s32 %s18, 1
        // Predicated region
        $region13: #{tpu_custom_call.1} parent=11 // pred_check
          %p190 = pneg %p65
        $region14: #{tpu_custom_call.1} parent=11 // pred_check_branch
          %192 = sbr.rel (%p190) target = $region16
        $region15: #{tpu_custom_call.1} parent=11 // pred_region
          _
        $region16: #{tpu_custom_call.1} parent=11 // pred_fallthru
          _
        // Predicated region
        $region17: #{tpu_custom_call.1} parent=11 // pred_check
          %p193 = pneg %p86
        $region18: #{tpu_custom_call.1} parent=11 // pred_check_branch
          %195 = sbr.rel (%p193) target = $region20
        $region19: #{tpu_custom_call.1} parent=11 // pred_region
          _
        $region20: #{tpu_custom_call.1} parent=11 // pred_fallthru
          _
        // Predicated region
        $region21: #{tpu_custom_call.1} parent=11 // pred_check
          %p196 = pneg %p107
        $region22: #{tpu_custom_call.1} parent=11 // pred_check_branch
          %198 = sbr.rel (%p196) target = $region24
        $region23: #{tpu_custom_call.1} parent=11 // pred_region
          _
        $region24: #{tpu_custom_call.1} parent=11 // pred_fallthru
          _
        // Predicated region
        $region25: #{tpu_custom_call.1} parent=11 // pred_check
          %p199 = pneg %p128
        $region26: #{tpu_custom_call.1} parent=11 // pred_check_branch
          %201 = sbr.rel (%p199) target = $region28
        $region27: #{tpu_custom_call.1} parent=11 // pred_region
          _
        $region28: #{tpu_custom_call.1} parent=11 // pred_fallthru
          _
        // Predicated region
        $region29: #{tpu_custom_call.1} parent=11 // pred_check
          %p202 = pneg %p149
        $region30: #{tpu_custom_call.1} parent=11 // pred_check_branch
          %204 = sbr.rel (%p202) target = $region32
        $region31: #{tpu_custom_call.1} parent=11 // pred_region
          _
        $region32: #{tpu_custom_call.1} parent=11 // pred_fallthru
          _
      $region12: #{tpu_custom_call.1} parent=5 // pred_fallthru
        _
      %p205 = scmp.lt.s32.totalorder %s18, 2
      // Predicated region
      $region33: #{tpu_custom_call.1} parent=5 // pred_check
        %p206 = pneg %p205
      $region34: #{tpu_custom_call.1} parent=5 // pred_check_branch
        %208 = sbr.rel (%p206) target = $region36
      $region35: #{tpu_custom_call.1} parent=5 // pred_region
        // Predicated region
        $region37: #{tpu_custom_call.1} parent=35 // pred_check
          %p209 = pneg %p38
        $region38: #{tpu_custom_call.1} parent=35 // pred_check_branch
          %211 = sbr.rel (%p209) target = $region40
        $region39: #{tpu_custom_call.1} parent=35 // pred_region
          %s212 = sand.u32 %s28, 1
          %s213 = scalar_lea.sflag [#allocation3], %s212
          %s214 = sand.u32 %s28, 1
          %s215 = smul.addr %s214, 32
          %s216 = scalar_lea.vmem [#allocation2], %s215
          %s218 = ssub.s32 512, 512
          %219 = vsyncadd %s213, %s218
          %s220 = smul.addr %s18, 4
          %s221 = smul.addr %s220, 128
          %s222 = scalar_lea.hbm %s0, %s221
          %s223 = sshll.u32 %s216, 4
          %s224 = int_to_ptr.vmem [resolvable:$true] %s223
          %229 = dma.hbm_to_vmem [thread:$0]  %s222, 512, %s224, %s213, 256, 256, 16
        $region40: #{tpu_custom_call.1} parent=35 // pred_fallthru
          _
      $region36: #{tpu_custom_call.1} parent=5 // pred_fallthru
        _
      %p230 = scmp.le.s32.totalorder 1, %s18
      %p231 = scmp.lt.s32.totalorder %s18, 3
      %p232 = pnand %p230, %p231
      %p233 = pneg %p232
      // Predicated region
      $region41: #{tpu_custom_call.1} parent=5 // pred_check
        _
      $region42: #{tpu_custom_call.1} parent=5 // pred_check_branch
        %235 = sbr.rel (%p232) target = $region44
      $region43: #{tpu_custom_call.1} parent=5 // pred_region
        %s236 = ssub.s32 %s18, 1
        %s237 = sand.u32 %s31, 1
        %s238 = scalar_lea.sflag [#allocation3], %s237
        %s239 = sand.u32 %s31, 1
        %s240 = smul.addr %s239, 32
        %s241 = scalar_lea.vmem [#allocation2], %s240
        // Predicated region
        $region45: #{tpu_custom_call.1} parent=43 // pred_check
          %p242 = pneg %p44
        $region46: #{tpu_custom_call.1} parent=43 // pred_check_branch
          %244 = sbr.rel (%p242) target = $region48
        $region47: #{tpu_custom_call.1} parent=43 // pred_region
          %245 = dma.done %s238, 512
        $region48: #{tpu_custom_call.1} parent=43 // pred_fallthru
          _
        %s246 = sand.u32 %s31, 1
        %s247 = scalar_lea.sflag [#allocation3], %s246
        %s248 = sand.u32 %s31, 1
        %s249 = smul.addr %s248, 32
        %s250 = scalar_lea.vmem [#allocation2], %s249
        %p251 = pneg %p44
        %p252 = pneg %p41
        %p253 = pneg %p65
        %p254 = pneg %p62
        %p255 = pneg %p86
        %p256 = pneg %p83
        %p257 = pneg %p107
        %p258 = pneg %p104
        %p259 = pneg %p128
        %p260 = pneg %p125
        %p261 = pneg %p149
        %p262 = pneg %p146
        %p263 = pneg %p175
        %p264 = pneg %p172
        %s265 = sand.u32 %s162, 1
        %s266 = scalar_lea.sflag [#allocation4], %s265
        %s267 = sand.u32 %s162, 1
        %s268 = smul.addr %s267, 32
        %s269 = scalar_lea.vmem [#allocation5], %s268
        %v270 = vld [vmem:[%s2] sm:$0xf]
        %v271 = vld [vmem:[%s3] sm:$0xf]
        %v272 = vld [vmem:[%s4] sm:$0xff]
        %v273 = vld [vmem:[%s4 + $0x8] sm:$0xff]
        %v274 = vld [vmem:[%s5] sm:$0xf]
        %v275 = vld [vmem:[%s5 + $0x8] sm:$0xf]
        %v276 = vld [vmem:[%s5 + $0x10] sm:$0xff]
        %v277 = vld [vmem:[%s5 + $0x18] sm:$0xff]
        %v278 = vld [vmem:[%s1] sm:$0xff]
        %v279 = vld [vmem:[%s1 + $0x8] sm:$0xff]
        %v280 = vld [vmem:[%s1 + $0x10] sm:$0x1]
        %v281 = vld [vmem:[%s1 + $0x18] sm:$0x1]
        %v282 = vld [vmem:[%s241] sm:$0xff]
        %v283 = vld [vmem:[%s241 + $0x8] sm:$0xff]
        %v284 = vld [vmem:[%s241 + $0x10] sm:$0xff]
        %v285 = vld [vmem:[%s241 + $0x18] sm:$0xff]
        %287 = vset.pattern.permute.xlu0 0
        %288 = vperm.xlu0 %287, %v274
        %v289 = vpop.permute.xlu0 %288
        %vm291 = vcmask 130048
        %v293 = vsel %vm291, %v270, 0
        %295 = vmatprep.subr.mxu0 0.0
        %296 = vmatpush1.msra.mxu0 0.0
        %297 = vmatprep.subr.mxu0 0.0
        %298 = vmatpush1.msra.mxu0 0.0
        %299 = vmatprep.subr.mxu0 0.0
        %300 = vmatpush1.msra.mxu0 0.0
        %301 = vmatprep.subr.mxu0 0.0
        %302 = vmatpush1.msra.mxu0 0.0
        %303 = vmatprep.subr.mxu0 0.0
        %304 = vmatpush1.msra.mxu0 0.0
        %305 = vmatprep.subr.mxu0 0.0
        %306 = vmatpush1.msra.mxu0 0.0
        %307 = vmatprep.subr.mxu0 0.0
        %308 = vmatpush1.msra.mxu0 0.0
        %309 = vmatprep.subr.mxu0 0.0
        %310 = vmatpush1.msra.mxu0 0.0
        %311 = vmatprep.subr.mxu0 0.0
        %312 = vmatpush1.msra.mxu0 0.0
        %313 = vmatprep.subr.mxu0 0.0
        %314 = vmatpush1.msra.mxu0 0.0
        %315 = vmatprep.subr.mxu0 0.0
        %316 = vmatpush1.msra.mxu0 0.0
        %317 = vmatprep.subr.mxu0 0.0
        %318 = vmatpush1.msra.mxu0 0.0
        %319 = vmatprep.subr.mxu0 0.0
        %320 = vmatpush1.msra.mxu0 0.0
        %321 = vmatprep.subr.mxu0 0.0
        %322 = vmatpush1.msra.mxu0 0.0
        %323 = vmatprep.subr.mxu0 %v285
        %324 = vmatpush1.msra.mxu0 %v284
        %325 = vmatprep.subr.mxu0 %v283
        %326 = vmatpush1.msra.mxu0 %v282
        %327 = vmatprep.subr.mxu0 0.0
        %328 = vmatpush2.msra.mxu0 0.0
        %329 = vmatprep.subr.mxu0 0.0
        %330 = vmatpush2.msra.mxu0 0.0
        %331 = vmatprep.subr.mxu0 0.0
        %332 = vmatpush2.msra.mxu0 0.0
        %333 = vmatprep.subr.mxu0 0.0
        %334 = vmatpush2.msra.mxu0 0.0
        %335 = vmatprep.subr.mxu0 0.0
        %336 = vmatpush2.msra.mxu0 0.0
        %337 = vmatprep.subr.mxu0 0.0
        %338 = vmatpush2.msra.mxu0 0.0
        %339 = vmatprep.subr.mxu0 0.0
        %340 = vmatpush2.msra.mxu0 0.0
        %341 = vmatprep.subr.mxu0 0.0
        %342 = vmatpush2.msra.mxu0 0.0
        %343 = vmatprep.subr.mxu0 0.0
        %344 = vmatpush2.msra.mxu0 0.0
        %345 = vmatprep.subr.mxu0 0.0
        %346 = vmatpush2.msra.mxu0 0.0
        %347 = vmatprep.subr.mxu0 0.0
        %348 = vmatpush2.msra.mxu0 0.0
        %349 = vmatprep.subr.mxu0 0.0
        %350 = vmatpush2.msra.mxu0 0.0
        %351 = vmatprep.subr.mxu0 0.0
        %352 = vmatpush2.msra.mxu0 0.0
        %353 = vmatprep.subr.mxu0 0.0
        %354 = vmatpush2.msra.mxu0 0.0
        %355 = vmatprep.subr.mxu0 0.0
        %356 = vmatpush2.msra.mxu0 0.0
        %357 = vmatprep.subr.mxu0 0.0
        %358 = vmatpush2.msra.mxu0 0.0
        %359 = vmatprep.mubr.f32.mxu0 0.0
        %360 = vmatmul.mubr.f32.gmra.mxu0 %v293
        %v361 = vpop.f32.mrf.mxu0
        %v362 = vadd.f32 %v289, %v361
        %v363 = vpop.f32.mrf.mxu0
        %v364 = vadd.f32 %v289, %v363
        %365 = vdwg.mxu0
        %v366 = vmax.f32 %v362, 0.0
        %v367 = vmax.f32 %v364, 0.0
        %368 = vrot.lane.b32.xlu0 %v366, 17
        %v369 = vpop.permute.xlu0 %368
        %370 = vrot.lane.b32.xlu0 %v367, 17
        %v371 = vpop.permute.xlu0 %370
        %v372 = vlaneseq
        %v373 = vand.u32 %v372, 127
        %vm374 = vcmp.lt.s32.totalorder %v373, 17
        %v375 = vsel %vm374, %v369, %v371
        %v376 = vsel %vm374, %v371, %v369
        %v377 = vlaneseq
        %v378 = vshrl.u32 %v377, 7
        %v379 = vsub.s32 0, %v378
        %v380 = vrot.slane %v278, %v379
        %v381 = vlaneseq
        %v382 = vshrl.u32 %v381, 7
        %v383 = vsub.s32 0, %v382
        %v384 = vrot.slane %v279, %v383
        %v385 = vmul.f32 %v376, %v380
        %v386 = vmul.f32 %v375, %v384
        %387 = vrot.lane.b32.xlu0 %v366, 16
        %v388 = vpop.permute.xlu0 %387
        %389 = vrot.lane.b32.xlu0 %v367, 16
        %v390 = vpop.permute.xlu0 %389
        %vm391 = vcmp.lt.s32.totalorder %v373, 16
        %v392 = vsel %vm391, %v388, %v390
        %v393 = vsel %vm391, %v390, %v388
        %v394 = vlaneseq
        %v395 = vshrl.u32 %v394, 7
        %v396 = vsub.s32 1, %v395
        %v397 = vrot.slane %v278, %v396
        %v398 = vlaneseq
        %v399 = vshrl.u32 %v398, 7
        %v400 = vsub.s32 1, %v399
        %v401 = vrot.slane %v279, %v400
        %v402 = vmul.f32 %v393, %v397
        %v403 = vmul.f32 %v392, %v401
        %404 = vrot.lane.b32.xlu0 %v366, 15
        %v405 = vpop.permute.xlu0 %404
        %406 = vrot.lane.b32.xlu0 %v367, 15
        %v407 = vpop.permute.xlu0 %406
        %vm408 = vcmp.lt.s32.totalorder %v373, 15
        %v409 = vsel %vm408, %v405, %v407
        %v410 = vsel %vm408, %v407, %v405
        %v411 = vlaneseq
        %v412 = vshrl.u32 %v411, 7
        %v413 = vsub.s32 2, %v412
        %v414 = vrot.slane %v278, %v413
        %v415 = vlaneseq
        %v416 = vshrl.u32 %v415, 7
        %v417 = vsub.s32 2, %v416
        %v418 = vrot.slane %v279, %v417
        %v419 = vmul.f32 %v410, %v414
        %v420 = vmul.f32 %v409, %v418
        %421 = vrot.lane.b32.xlu0 %v366, 1
        %v422 = vpop.permute.xlu0 %421
        %423 = vrot.lane.b32.xlu0 %v367, 1
        %v424 = vpop.permute.xlu0 %423
        %vm425 = vcmp.lt.s32.totalorder %v373, 1
        %v426 = vsel %vm425, %v422, %v424
        %v427 = vsel %vm425, %v424, %v422
        %v428 = vlaneseq
        %v429 = vshrl.u32 %v428, 7
        %v430 = vsub.s32 3, %v429
        %v431 = vrot.slane %v278, %v430
        %v432 = vlaneseq
        %v433 = vshrl.u32 %v432, 7
        %v434 = vsub.s32 3, %v433
        %v435 = vrot.slane %v279, %v434
        %v436 = vmul.f32 %v427, %v431
        %v437 = vmul.f32 %v426, %v435
        %v438 = vlaneseq
        %v439 = vshrl.u32 %v438, 7
        %v440 = vsub.s32 4, %v439
        %v441 = vrot.slane %v278, %v440
        %v442 = vlaneseq
        %v443 = vshrl.u32 %v442, 7
        %v444 = vsub.s32 4, %v443
        %v445 = vrot.slane %v279, %v444
        %v446 = vmul.f32 %v366, %v441
        %v447 = vmul.f32 %v367, %v445
        %448 = vrot.lane.b32.xlu0 %v366, 127
        %v449 = vpop.permute.xlu0 %448
        %450 = vrot.lane.b32.xlu0 %v367, 127
        %v451 = vpop.permute.xlu0 %450
        %vm452 = vcmp.lt.s32.totalorder %v373, 127
        %v453 = vsel %vm452, %v449, %v451
        %v454 = vsel %vm452, %v451, %v449
        %v455 = vlaneseq
        %v456 = vshrl.u32 %v455, 7
        %v457 = vsub.s32 5, %v456
        %v458 = vrot.slane %v278, %v457
        %v459 = vlaneseq
        %v460 = vshrl.u32 %v459, 7
        %v461 = vsub.s32 5, %v460
        %v462 = vrot.slane %v279, %v461
        %v463 = vmul.f32 %v453, %v458
        %v464 = vmul.f32 %v454, %v462
        %465 = vrot.lane.b32.xlu0 %v366, 113
        %v466 = vpop.permute.xlu0 %465
        %467 = vrot.lane.b32.xlu0 %v367, 113
        %v468 = vpop.permute.xlu0 %467
        %vm469 = vcmp.lt.s32.totalorder %v373, 113
        %v470 = vsel %vm469, %v466, %v468
        %v471 = vsel %vm469, %v468, %v466
        %v472 = vlaneseq
        %v473 = vshrl.u32 %v472, 7
        %v474 = vsub.s32 6, %v473
        %v475 = vrot.slane %v278, %v474
        %v476 = vlaneseq
        %v477 = vshrl.u32 %v476, 7
        %v478 = vsub.s32 6, %v477
        %v479 = vrot.slane %v279, %v478
        %v480 = vmul.f32 %v470, %v475
        %v481 = vmul.f32 %v471, %v479
        %482 = vrot.lane.b32.xlu0 %v366, 112
        %v483 = vpop.permute.xlu0 %482
        %484 = vrot.lane.b32.xlu0 %v367, 112
        %v485 = vpop.permute.xlu0 %484
        %vm486 = vcmp.lt.s32.totalorder %v373, 112
        %v487 = vsel %vm486, %v483, %v485
        %v488 = vsel %vm486, %v485, %v483
        %v489 = vlaneseq
        %v490 = vshrl.u32 %v489, 7
        %v491 = vsub.s32 7, %v490
        %v492 = vrot.slane %v278, %v491
        %v493 = vlaneseq
        %v494 = vshrl.u32 %v493, 7
        %v495 = vsub.s32 7, %v494
        %v496 = vrot.slane %v279, %v495
        %v497 = vmul.f32 %v487, %v492
        %v498 = vmul.f32 %v488, %v496
        %499 = vrot.lane.b32.xlu0 %v366, 111
        %v500 = vpop.permute.xlu0 %499
        %501 = vrot.lane.b32.xlu0 %v367, 111
        %v502 = vpop.permute.xlu0 %501
        %vm503 = vcmp.lt.s32.totalorder %v373, 111
        %v504 = vsel %vm503, %v500, %v502
        %v505 = vsel %vm503, %v502, %v500
        %v506 = vlaneseq
        %v507 = vshrl.u32 %v506, 7
        %v508 = vsub.s32 0, %v507
        %v509 = vrot.slane %v280, %v508
        %v510 = vlaneseq
        %v511 = vshrl.u32 %v510, 7
        %v512 = vsub.s32 0, %v511
        %v513 = vrot.slane %v281, %v512
        %v514 = vmul.f32 %v504, %v509
        %v515 = vmul.f32 %v505, %v513
        %v518 = vrot.slane %v402, 4
        %v519 = vrot.slane %v403, 4
        %v524 = vrot.slane %v436, 4
        %v525 = vrot.slane %v437, 4
        %v530 = vrot.slane %v463, 4
        %v531 = vrot.slane %v464, 4
        %v536 = vrot.slane %v497, 4
        %v537 = vrot.slane %v498, 4
        %vm540 = vcmask 1043456
        %v541 = vsel %vm540, %v385, %v518
        %v542 = vsel %vm540, %v386, %v519
        %v543 = vsel %vm540, %v419, %v524
        %v544 = vsel %vm540, %v420, %v525
        %v545 = vsel %vm540, %v446, %v530
        %v546 = vsel %vm540, %v447, %v531
        %v547 = vsel %vm540, %v480, %v536
        %v548 = vsel %vm540, %v481, %v537
        %550 = vset.pattern.permute.xlu0 0
        %551 = vperm.xlu0 %550, %v275
        %v552 = vpop.permute.xlu0 %551
        %vm554 = vcmask 293888
        %v556 = vsel %vm554, %v271, 0
        %v559 = vsel %vm540, %v514, 0
        %v562 = vsel %vm540, %v515, 0
        %564 = vmatprep.subr.mxu0 0.0
        %565 = vmatpush1.msra.mxu0 0.0
        %566 = vmatprep.subr.mxu0 0.0
        %567 = vmatpush1.msra.mxu0 0.0
        %568 = vmatprep.subr.mxu0 0.0
        %569 = vmatpush1.msra.mxu0 0.0
        %570 = vmatprep.subr.mxu0 0.0
        %571 = vmatpush1.msra.mxu0 0.0
        %572 = vmatprep.subr.mxu0 0.0
        %573 = vmatpush1.msra.mxu0 0.0
        %574 = vmatprep.subr.mxu0 0.0
        %575 = vmatpush1.msra.mxu0 0.0
        %576 = vmatprep.subr.mxu0 0.0
        %577 = vmatpush1.msra.mxu0 0.0
        %578 = vmatprep.subr.mxu0 0.0
        %579 = vmatpush1.msra.mxu0 0.0
        %580 = vmatprep.subr.mxu0 0.0
        %581 = vmatpush1.msra.mxu0 0.0
        %582 = vmatprep.subr.mxu0 0.0
        %583 = vmatpush1.msra.mxu0 0.0
        %584 = vmatprep.subr.mxu0 0.0
        %585 = vmatpush1.msra.mxu0 0.0
        %586 = vmatprep.subr.mxu0 %v562
        %587 = vmatpush1.msra.mxu0 %v559
        %588 = vmatprep.subr.mxu0 %v548
        %589 = vmatpush1.msra.mxu0 %v547
        %590 = vmatprep.subr.mxu0 %v546
        %591 = vmatpush1.msra.mxu0 %v545
        %592 = vmatprep.subr.mxu0 %v544
        %593 = vmatpush1.msra.mxu0 %v543
        %594 = vmatprep.subr.mxu0 %v542
        %595 = vmatpush1.msra.mxu0 %v541
        %596 = vmatprep.subr.mxu0 0.0
        %597 = vmatpush2.msra.mxu0 0.0
        %598 = vmatprep.subr.mxu0 0.0
        %599 = vmatpush2.msra.mxu0 0.0
        %600 = vmatprep.subr.mxu0 0.0
        %601 = vmatpush2.msra.mxu0 0.0
        %602 = vmatprep.subr.mxu0 0.0
        %603 = vmatpush2.msra.mxu0 0.0
        %604 = vmatprep.subr.mxu0 0.0
        %605 = vmatpush2.msra.mxu0 0.0
        %606 = vmatprep.subr.mxu0 0.0
        %607 = vmatpush2.msra.mxu0 0.0
        %608 = vmatprep.subr.mxu0 0.0
        %609 = vmatpush2.msra.mxu0 0.0
        %610 = vmatprep.subr.mxu0 0.0
        %611 = vmatpush2.msra.mxu0 0.0
        %612 = vmatprep.subr.mxu0 0.0
        %613 = vmatpush2.msra.mxu0 0.0
        %614 = vmatprep.subr.mxu0 0.0
        %615 = vmatpush2.msra.mxu0 0.0
        %616 = vmatprep.subr.mxu0 0.0
        %617 = vmatpush2.msra.mxu0 0.0
        %618 = vmatprep.subr.mxu0 0.0
        %619 = vmatpush2.msra.mxu0 0.0
        %620 = vmatprep.subr.mxu0 0.0
        %621 = vmatpush2.msra.mxu0 0.0
        %622 = vmatprep.subr.mxu0 0.0
        %623 = vmatpush2.msra.mxu0 0.0
        %624 = vmatprep.subr.mxu0 0.0
        %625 = vmatpush2.msra.mxu0 0.0
        %626 = vmatprep.subr.mxu0 0.0
        %627 = vmatpush2.msra.mxu0 0.0
        %628 = vmatprep.mubr.f32.mxu0 0.0
        %629 = vmatmul.mubr.f32.gmra.mxu0 %v556
        %v630 = vpop.f32.mrf.mxu0
        %v631 = vadd.f32 %v552, %v630
        %v632 = vpop.f32.mrf.mxu0
        %v633 = vadd.f32 %v552, %v632
        %634 = vdwg.mxu0
        %v635 = vmax.f32 %v631, 0.0
        %v636 = vmax.f32 %v633, 0.0
        %638 = vset.pattern.permute.xlu0 0
        %639 = vperm.xlu0 %638, %v276
        %v640 = vpop.permute.xlu0 %639
        %643 = vset.pattern.permute.xlu0 0
        %644 = vperm.xlu0 %643, %v277
        %v645 = vpop.permute.xlu0 %644
        %vm647 = vcmask 31744
        %v649 = vsel %vm647, %v272, 0
        %v652 = vsel %vm647, %v273, 0
        %v655 = vsel %vm540, %v635, 0
        %v658 = vsel %vm540, %v636, 0
        %660 = vmatprep.subr.mxu0 0.0
        %661 = vmatpush1.msra.mxu0 0.0
        %662 = vmatprep.subr.mxu0 0.0
        %663 = vmatpush1.msra.mxu0 0.0
        %664 = vmatprep.subr.mxu0 0.0
        %665 = vmatpush1.msra.mxu0 0.0
        %666 = vmatprep.subr.mxu0 0.0
        %667 = vmatpush1.msra.mxu0 0.0
        %668 = vmatprep.subr.mxu0 0.0
        %669 = vmatpush1.msra.mxu0 0.0
        %670 = vmatprep.subr.mxu0 0.0
        %671 = vmatpush1.msra.mxu0 0.0
        %672 = vmatprep.subr.mxu0 0.0
        %673 = vmatpush1.msra.mxu0 0.0
        %674 = vmatprep.subr.mxu0 0.0
        %675 = vmatpush1.msra.mxu0 0.0
        %676 = vmatprep.subr.mxu0 0.0
        %677 = vmatpush1.msra.mxu0 0.0
        %678 = vmatprep.subr.mxu0 0.0
        %679 = vmatpush1.msra.mxu0 0.0
        %680 = vmatprep.subr.mxu0 0.0
        %681 = vmatpush1.msra.mxu0 0.0
        %682 = vmatprep.subr.mxu0 0.0
        %683 = vmatpush1.msra.mxu0 0.0
        %684 = vmatprep.subr.mxu0 0.0
        %685 = vmatpush1.msra.mxu0 0.0
        %686 = vmatprep.subr.mxu0 0.0
        %687 = vmatpush1.msra.mxu0 0.0
        %688 = vmatprep.subr.mxu0 0.0
        %689 = vmatpush1.msra.mxu0 0.0
        %690 = vmatprep.subr.mxu0 %v658
        %691 = vmatpush1.msra.mxu0 %v655
        %692 = vmatprep.subr.mxu0 0.0
        %693 = vmatpush2.msra.mxu0 0.0
        %694 = vmatprep.subr.mxu0 0.0
        %695 = vmatpush2.msra.mxu0 0.0
        %696 = vmatprep.subr.mxu0 0.0
        %697 = vmatpush2.msra.mxu0 0.0
        %698 = vmatprep.subr.mxu0 0.0
        %699 = vmatpush2.msra.mxu0 0.0
        %700 = vmatprep.subr.mxu0 0.0
        %701 = vmatpush2.msra.mxu0 0.0
        %702 = vmatprep.subr.mxu0 0.0
        %703 = vmatpush2.msra.mxu0 0.0
        %704 = vmatprep.subr.mxu0 0.0
        %705 = vmatpush2.msra.mxu0 0.0
        %706 = vmatprep.subr.mxu0 0.0
        %707 = vmatpush2.msra.mxu0 0.0
        %708 = vmatprep.subr.mxu0 0.0
        %709 = vmatpush2.msra.mxu0 0.0
        %710 = vmatprep.subr.mxu0 0.0
        %711 = vmatpush2.msra.mxu0 0.0
        %712 = vmatprep.subr.mxu0 0.0
        %713 = vmatpush2.msra.mxu0 0.0
        %714 = vmatprep.subr.mxu0 0.0
        %715 = vmatpush2.msra.mxu0 0.0
        %716 = vmatprep.subr.mxu0 0.0
        %717 = vmatpush2.msra.mxu0 0.0
        %718 = vmatprep.subr.mxu0 0.0
        %719 = vmatpush2.msra.mxu0 0.0
        %720 = vmatprep.subr.mxu0 0.0
        %721 = vmatpush2.msra.mxu0 0.0
        %722 = vmatprep.subr.mxu0 0.0
        %723 = vmatpush2.msra.mxu0 0.0
        %724 = vmatprep.mubr.f32.mxu0 0.0
        %725 = vmatmul.mubr.f32.gmra.mxu0 %v649
        %v726 = vpop.f32.mrf.mxu0
        %v727 = vadd.f32 %v640, %v726
        %v728 = vpop.f32.mrf.mxu0
        %v729 = vadd.f32 %v640, %v728
        %730 = vmatprep.mubr.f32.mxu0 0.0
        %731 = vmatmul.mubr.f32.gmra.mxu0 %v652
        %v732 = vpop.f32.mrf.mxu0
        %v733 = vadd.f32 %v645, %v732
        %v734 = vpop.f32.mrf.mxu0
        %v735 = vadd.f32 %v645, %v734
        %736 = vdwg.mxu0
        %v737 = vadd.f32 %v727, %v282
        %v738 = vadd.f32 %v729, %v283
        %v739 = vadd.f32 %v733, %v284
        %v740 = vadd.f32 %v735, %v285
        %v741 = vmax.f32 %v737, 0.0
        %v742 = vmax.f32 %v738, 0.0
        %v743 = vmax.f32 %v739, 0.0
        %v744 = vmax.f32 %v740, 0.0
        %745 = vst [vmem:[%s269] sm:$0xff] %v741
        %746 = vst [vmem:[%s269 + $0x8] sm:$0xff] %v742
        %747 = vst [vmem:[%s269 + $0x10] sm:$0xff] %v743
        %748 = vst [vmem:[%s269 + $0x18] sm:$0xff] %v744
        %s749 = sand.u32 %s162, 1
        %s750 = scalar_lea.sflag [#allocation4], %s749
        %s751 = sand.u32 %s162, 1
        %s752 = smul.addr %s751, 32
        %s753 = scalar_lea.vmem [#allocation5], %s752
        // Predicated region
        $region49: #{tpu_custom_call.1} parent=43 // pred_check
          %p754 = pneg %p172
        $region50: #{tpu_custom_call.1} parent=43 // pred_check_branch
          %756 = sbr.rel (%p754) target = $region52
        $region51: #{tpu_custom_call.1} parent=43 // pred_region
          %s758 = ssub.s32 512, 512
          %759 = vsyncadd %s750, %s758
          %s760 = smul.addr %s23, 4
          %s761 = smul.addr %s760, 128
          %s762 = scalar_lea.hbm %s6, %s761
          %s763 = sshll.u32 %s753, 4
          %s764 = int_to_ptr.vmem [resolvable:$true] %s763
          %769 = dma.vmem_to_hbm [thread:$0]  %s764, 512, %s762, %s750, 256, 256, 16
        $region52: #{tpu_custom_call.1} parent=43 // pred_fallthru
          _
      $region44: #{tpu_custom_call.1} parent=5 // pred_fallthru
        _
      %p770 = scmp.le.s32.totalorder 2, %s18
      // Predicated region
      $region53: #{tpu_custom_call.1} parent=5 // pred_check
        %p771 = pneg %p770
      $region54: #{tpu_custom_call.1} parent=5 // pred_check_branch
        %773 = sbr.rel (%p771) target = $region56
      $region55: #{tpu_custom_call.1} parent=5 // pred_region
        %s774 = ssub.s32 %s18, 2
        // Predicated region
        $region57: #{tpu_custom_call.1} parent=55 // pred_check
          %p775 = pneg %p178
        $region58: #{tpu_custom_call.1} parent=55 // pred_check_branch
          %777 = sbr.rel (%p775) target = $region60
        $region59: #{tpu_custom_call.1} parent=55 // pred_region
          %s778 = sand.u32 %s163, 1
          %s779 = scalar_lea.sflag [#allocation4], %s778
          %s780 = sand.u32 %s163, 1
          %s781 = smul.addr %s780, 32
          %s782 = scalar_lea.vmem [#allocation5], %s781
          %783 = dma.done %s779, 512
        $region60: #{tpu_custom_call.1} parent=55 // pred_fallthru
          _
      $region56: #{tpu_custom_call.1} parent=5 // pred_fallthru
        _
    $region6: #{tpu_custom_call.1} parent=1 // loop_footer
      %s22 = sadd.s32 1, %s18
    $region7: #{tpu_custom_call.1} parent=1 // loop_footer_branch
      %17 = sbr.rel target = $region3
    $region8: #{tpu_custom_call.1} parent=1 // loop_exit
      _
    %784 = vsyncpa [#allocation3], 1
    %s785 = scalar_lea.sflag [#allocation3], 1
    %786 = vsyncpa %s785, 1
    %787 = vsyncpa [#allocation4], 1
    %s788 = scalar_lea.sflag [#allocation4], 1
    %789 = vsyncpa %s788, 1

</llo_original>
